<compile_context>
chip_gen: v7x
topology: tpu7x:2x2x1
jax: 0.10.0
libtpu: 0.0.40
codegen_flags: <defaults>
</compile_context>

<pallas_src>
import functools

import jax
import jax.numpy as jnp
from jax.experimental import pallas as pl
from jax.experimental.pallas import tpu as pltpu


def cross_attention2_kernel(x_ref, wqkv_ref, wo_ref, bo_ref, bdiag_ref, o_ref, *,
                            inner, inv_dim_head):
    cdt = wqkv_ref.dtype                              # MXU operand dtype (param dtype)
    x = x_ref[...].astype(cdt)                        # in-kernel cast (hides under MXU)

    # Fused QKV projection: one MXU pass, f32 accumulation.
    qkv = jnp.dot(x, wqkv_ref[...], preferred_element_type=jnp.float32)  # (tb, 3*inner)
    q = qkv[:, :inner]                                # lane-aligned static slices
    k = qkv[:, inner:2 * inner]
    v = qkv[:, 2 * inner:]

    # Per-head dot product via ONE block-diagonal matmul (softmax scale folded in):
    # dots[:, j] = scale * sum_{i in head(j)} q_i * k_i, replicated over the head's
    # dim_head lanes -> full-lane slab, no narrow (tb, heads) intermediate.
    qk = (q * k).astype(cdt)
    dots = jnp.dot(qk, bdiag_ref[...], preferred_element_type=jnp.float32)  # (tb, inner)

    # Softmax over heads computed on the lane-replicated slab:
    # lane-max == head-max; lane-sum == dim_head * head-sum (1/dim_head folded in).
    m = jnp.max(dots, axis=-1, keepdims=True)
    e = jnp.exp(dots - m)
    denom = jnp.sum(e, axis=-1, keepdims=True) * jnp.float32(inv_dim_head)
    attn = e * pl.reciprocal(denom, approx=True)      # EUP slot

    out = (attn * v).astype(cdt)                      # (tb, inner)

    # Output projection directly into the unpadded (tb, dim) block.
    y = jnp.dot(out, wo_ref[...], preferred_element_type=jnp.float32) + bo_ref[...]
    o_ref[...] = y.astype(o_ref.dtype)


def _round_up(x, m):
    return ((x + m - 1) // m) * m


def _vmem_footprint(tb, dim, inner, x_sz, p_sz, o_sz):
    """Conservative per-tile VMEM estimate (double-buffered IO + resident weights
    + the live f32 intermediate chain, counted at ~14 tb*inner slabs)."""
    weights = 2 * (dim * 3 * inner * p_sz            # fused QKV weight
                   + inner * dim * p_sz              # to_out weight
                   + dim * 4                         # bias (f32)
                   + inner * inner * p_sz)           # block-diagonal one-hot
    io = 2 * tb * dim * x_sz + 2 * tb * dim * o_sz   # double-buffered x / out tiles
    interm = 14 * tb * inner * 4 + tb * dim * p_sz   # qkv/qk/dots/e/attn/out chain + cast
    return weights + io + interm


def cross_attention2(x, wq, wk, wv, wo, bo, *, heads, dim_head,
                     param_dtype=jnp.bfloat16, out_dtype=None, block_b=None):
    """x: (b, dim). Weights in PyTorch Linear layout: w*(out, in), bo (dim,)."""
    b, dim = x.shape
    inner = heads * dim_head
    scale = float(dim_head) ** -0.5
    out_dtype = x.dtype if out_dtype is None else out_dtype

    # --- wrapper-side prep (runs once / constant-folds under jit) -------------
    # Fused, pre-transposed QKV weight: (dim, 3*inner) in the MXU dtype.
    wqkv = jnp.concatenate(
        [jnp.asarray(wq).T, jnp.asarray(wk).T, jnp.asarray(wv).T], axis=1
    ).astype(param_dtype)
    woT = jnp.asarray(wo).T.astype(param_dtype)                 # (inner, dim)
    bo2 = jnp.asarray(bo).reshape(1, dim).astype(jnp.float32)   # (1, dim)

    # Block-diagonal one-hot with the softmax scale folded in (resident input).
    hid = jnp.arange(inner) // dim_head
    bdiag = jnp.where(hid[:, None] == hid[None, :], scale, 0.0).astype(param_dtype)

    # --- generation-aware tile sizing -----------------------------------------
    try:
        vmem_cap = int(pltpu.get_tpu_info().vmem_capacity_bytes)
    except Exception:
        vmem_cap = 64 << 20                          # conservative (v7x-sized) fallback
    # ~40 MiB cap on v7x (64 MiB physical); ~96 MiB on v5e/v6e (128 MiB physical).
    frac = 0.75 if vmem_cap >= (96 << 20) else 0.65
    vmem_limit = int(frac * vmem_cap)
    budget = int(0.85 * vmem_limit)                  # headroom for Mosaic internal scratch

    x_sz = jnp.dtype(x.dtype).itemsize
    p_sz = jnp.dtype(param_dtype).itemsize
    o_sz = jnp.dtype(out_dtype).itemsize

    b_rows = _round_up(b, 8)                         # sublane-aligned row count
    target = 4096 if block_b is None else block_b    # big tiles: amortize step overhead
    tb = _round_up(min(target, b_rows), 8)
    while tb > 8 and _vmem_footprint(tb, dim, inner, x_sz, p_sz, o_sz) > budget:
        tb = _round_up(max(tb // 2, 8), 8)
    # v7x megacore: the single "parallel" grid axis is what shards across the two
    # TensorCores -> guarantee >= 2 tiles whenever the batch allows it.
    if pl.cdiv(b_rows, tb) < 2 and b_rows >= 16:
        tb = _round_up(pl.cdiv(b_rows, 2), 8)
    grid = (pl.cdiv(b_rows, tb),)

    # No wrapper-side dtype cast / column pad; rows padded only to a sublane
    # multiple (no-op when b % 8 == 0). Ragged last tile handled by Pallas.
    x_in = x if b == b_rows else jnp.pad(x, ((0, b_rows - b), (0, 0)))

    kernel = functools.partial(cross_attention2_kernel, inner=inner,
                               inv_dim_head=1.0 / float(dim_head))

    y = pl.pallas_call(
        kernel,
        out_shape=jax.ShapeDtypeStruct((b_rows, dim), out_dtype),
        grid=grid,
        in_specs=[
            pl.BlockSpec((tb, dim), lambda i: (i, 0)),          # x: pipelined per-tile
            pl.BlockSpec((dim, 3 * inner), lambda i: (0, 0)),   # fused QKV weight: resident
            pl.BlockSpec((inner, dim), lambda i: (0, 0)),       # to_out weight: resident
            pl.BlockSpec((1, dim), lambda i: (0, 0)),           # to_out bias: resident
            pl.BlockSpec((inner, inner), lambda i: (0, 0)),     # block-diag one-hot: resident
        ],
        out_specs=pl.BlockSpec((tb, dim), lambda i: (i, 0)),    # unpadded columns
        compiler_params=pltpu.CompilerParams(
            dimension_semantics=("parallel",),
            vmem_limit_bytes=vmem_limit,
        ),
    )(x_in, wqkv, woT, bo2, bdiag)

    return y if b == b_rows else y[:b]


def reference(x, wq, wk, wv, wo, bo, *, heads, dim_head):
    """Pure-JAX reference mirroring the PyTorch forward (eval mode)."""
    b, dim = x.shape
    scale = float(dim_head) ** -0.5
    q = x @ wq.T
    k = x @ wk.T
    v = x @ wv.T
    qh = q.reshape(b, heads, dim_head)
    kh = k.reshape(b, heads, dim_head)
    vh = v.reshape(b, heads, dim_head)
    dots = jnp.sum(qh * kh, axis=-1) * scale          # (b, heads)
    attn = jax.nn.softmax(dots, axis=-1)
    out = (attn[:, :, None] * vh).reshape(b, heads * dim_head)
    return out @ wo.T + bo


if __name__ == "__main__":
    # Small shapes consistent with the module's forward (x_qkv is 2-D (batch, dim)).
    batch, dim = 2, 32
    heads, dim_head = 8, 16
    inner_dim = heads * dim_head                      # 128 (lane-aligned)

    key = jax.random.PRNGKey(0)
    kx, kq, kk, kv, ko, kb = jax.random.split(key, 6)
    x = jax.random.normal(kx, (batch, dim), dtype=jnp.float32)
    wq = jax.random.normal(kq, (inner_dim, dim), dtype=jnp.float32) * 0.05
    wk = jax.random.normal(kk, (inner_dim, dim), dtype=jnp.float32) * 0.05
    wv = jax.random.normal(kv, (inner_dim, dim), dtype=jnp.float32) * 0.05
    wo = jax.random.normal(ko, (dim, inner_dim), dtype=jnp.float32) * 0.05
    bo = jax.random.normal(kb, (dim,), dtype=jnp.float32) * 0.05

    y_ref = reference(x, wq, wk, wv, wo, bo, heads=heads, dim_head=dim_head)

    # f32-parameter path: tight accuracy check (approx reciprocal -> ~1e-4 rel).
    y32 = cross_attention2(x, wq, wk, wv, wo, bo, heads=heads, dim_head=dim_head,
                           param_dtype=jnp.float32)
    y32 = jax.block_until_ready(y32)
    assert y32.shape == (batch, dim)
    assert jnp.allclose(y32, y_ref, atol=2e-3, rtol=2e-3), "f32 path mismatch"

    # bf16-parameter path (production / MXU-fast config): looser tolerance due
    # to bf16 input/weight/logit rounding (accumulation stays f32).
    ybf = cross_attention2(x, wq, wk, wv, wo, bo, heads=heads, dim_head=dim_head,
                           param_dtype=jnp.bfloat16)
    ybf = jax.block_until_ready(ybf)
    assert ybf.shape == (batch, dim)
    assert jnp.allclose(ybf, y_ref, atol=2e-2, rtol=2e-2), "bf16 path mismatch"

    print("KERNEL_OK")
</pallas_src>

<mosaic_0001>
module attributes {stable_mosaic.version = 11 : i64} {
  func.func @cross_attention2_kernel(%arg0: i32, %arg1: memref<8x32xf32, #tpu.memory_space<vmem>>, %arg2: memref<32x384xf32, #tpu.memory_space<vmem>>, %arg3: memref<128x32xf32, #tpu.memory_space<vmem>>, %arg4: memref<1x32xf32, #tpu.memory_space<vmem>>, %arg5: memref<128x128xf32, #tpu.memory_space<vmem>>, %arg6: memref<8x32xf32, #tpu.memory_space<vmem>>) attributes {dimension_semantics = [#tpu.dimension_semantics<parallel>], iteration_bounds = array<i64: 1>, scalar_prefetch = 0 : i64, scratch_operands = 0 : i64, tpu.core_type = #tpu.core_type<tc>, window_params = [{transform_indices = @transform_0, window_bounds = array<i64: 8, 32>}, {pipeline_mode = #tpu.pipeline_mode<synchronous>, transform_indices = @transform_1, window_bounds = array<i64: 32, 384>}, {pipeline_mode = #tpu.pipeline_mode<synchronous>, transform_indices = @transform_2, window_bounds = array<i64: 128, 32>}, {pipeline_mode = #tpu.pipeline_mode<synchronous>, transform_indices = @transform_3, window_bounds = array<i64: 1, 32>}, {pipeline_mode = #tpu.pipeline_mode<synchronous>, transform_indices = @transform_4, window_bounds = array<i64: 128, 128>}, {transform_indices = @transform_5, window_bounds = array<i64: 8, 32>}]} {
    %c0 = arith.constant 0 : index
    %c0_0 = arith.constant 0 : index
    %0 = vector.load %arg1[%c0, %c0_0] : memref<8x32xf32, #tpu.memory_space<vmem>>, vector<8x32xf32>
    %c0_1 = arith.constant 0 : index
    %c0_2 = arith.constant 0 : index
    %1 = vector.load %arg2[%c0_1, %c0_2] : memref<32x384xf32, #tpu.memory_space<vmem>>, vector<32x384xf32>
    %cst = arith.constant dense<0.000000e+00> : vector<8x384xf32>
    %2 = tpu.matmul %0, %1, %cst {dimension_numbers = #tpu.dot_dimension_numbers<[1], [0], [0], [1], [0, 0, 1, 1], [], []>} : vector<8x32xf32>, vector<32x384xf32>, vector<8x384xf32> -> vector<8x384xf32>
    %3 = vector.extract_strided_slice %2 {offsets = [0, 0], sizes = [8, 128], strides = [1, 1]} : vector<8x384xf32> to vector<8x128xf32>
    %4 = vector.extract_strided_slice %2 {offsets = [0, 128], sizes = [8, 128], strides = [1, 1]} : vector<8x384xf32> to vector<8x128xf32>
    %5 = vector.extract_strided_slice %2 {offsets = [0, 256], sizes = [8, 128], strides = [1, 1]} : vector<8x384xf32> to vector<8x128xf32>
    %6 = arith.mulf %3, %4 : vector<8x128xf32>
    %c0_3 = arith.constant 0 : index
    %c0_4 = arith.constant 0 : index
    %7 = vector.load %arg5[%c0_3, %c0_4] : memref<128x128xf32, #tpu.memory_space<vmem>>, vector<128x128xf32>
    %cst_5 = arith.constant dense<0.000000e+00> : vector<8x128xf32>
    %8 = tpu.matmul %6, %7, %cst_5 {dimension_numbers = #tpu.dot_dimension_numbers<[1], [0], [0], [1], [0, 0, 1, 1], [], []>} : vector<8x128xf32>, vector<128x128xf32>, vector<8x128xf32> -> vector<8x128xf32>
    %cst_6 = arith.constant dense<0xFF800000> : vector<8xf32>
    %9 = vector.multi_reduction <maximumf>, %8, %cst_6 [1] : vector<8x128xf32> to vector<8xf32>
    %10 = vector.shape_cast %9 : vector<8xf32> to vector<8x1xf32>
    %11 = vector.broadcast %10 : vector<8x1xf32> to vector<8x128xf32>
    %12 = arith.subf %8, %11 : vector<8x128xf32>
    %13 = math.exp %12 : vector<8x128xf32>
    %cst_7 = arith.constant dense<0.000000e+00> : vector<8xf32>
    %14 = vector.multi_reduction <add>, %13, %cst_7 [1] : vector<8x128xf32> to vector<8xf32>
    %15 = vector.shape_cast %14 : vector<8xf32> to vector<8x1xf32>
    %cst_8 = arith.constant 6.250000e-02 : f32
    %16 = vector.broadcast %cst_8 : f32 to vector<8x1xf32>
    %17 = arith.mulf %15, %16 : vector<8x1xf32>
    %18 = tpu.reciprocal %17 {approx = true} : vector<8x1xf32> -> vector<8x1xf32>
    %19 = vector.broadcast %18 : vector<8x1xf32> to vector<8x128xf32>
    %20 = arith.mulf %13, %19 : vector<8x128xf32>
    %21 = arith.mulf %20, %5 : vector<8x128xf32>
    %c0_9 = arith.constant 0 : index
    %c0_10 = arith.constant 0 : index
    %22 = vector.load %arg3[%c0_9, %c0_10] : memref<128x32xf32, #tpu.memory_space<vmem>>, vector<128x32xf32>
    %cst_11 = arith.constant dense<0.000000e+00> : vector<8x32xf32>
    %23 = tpu.matmul %21, %22, %cst_11 {dimension_numbers = #tpu.dot_dimension_numbers<[1], [0], [0], [1], [0, 0, 1, 1], [], []>} : vector<8x128xf32>, vector<128x32xf32>, vector<8x32xf32> -> vector<8x32xf32>
    %c0_12 = arith.constant 0 : index
    %c0_13 = arith.constant 0 : index
    %24 = vector.load %arg4[%c0_12, %c0_13] : memref<1x32xf32, #tpu.memory_space<vmem>>, vector<1x32xf32>
    %25 = vector.broadcast %24 : vector<1x32xf32> to vector<8x32xf32>
    %26 = arith.addf %23, %25 : vector<8x32xf32>
    %c0_14 = arith.constant 0 : index
    %c0_15 = arith.constant 0 : index
    %27 = vector.load %arg6[%c0_14, %c0_15] : memref<8x32xf32, #tpu.memory_space<vmem>>, vector<8x32xf32>
    tpu.vector_store %arg6[%c0_14, %c0_15], %26 {strides = array<i32>} : memref<8x32xf32, #tpu.memory_space<vmem>>, vector<8x32xf32>,
    return
  }
  func.func @transform_0(%arg0: i32) -> (i32, i32) {
    %c0_i32 = arith.constant 0 : i32
    %c0_i32_0 = arith.constant 0 : i32
    return %arg0, %c0_i32 : i32, i32
  }
  func.func @transform_1(%arg0: i32) -> (i32, i32) {
    %c0_i32 = arith.constant 0 : i32
    %c0_i32_0 = arith.constant 0 : i32
    %c0_i32_1 = arith.constant 0 : i32
    return %c0_i32, %c0_i32_0 : i32, i32
  }
  func.func @transform_2(%arg0: i32) -> (i32, i32) {
    %c0_i32 = arith.constant 0 : i32
    %c0_i32_0 = arith.constant 0 : i32
    %c0_i32_1 = arith.constant 0 : i32
    return %c0_i32, %c0_i32_0 : i32, i32
  }
  func.func @transform_3(%arg0: i32) -> (i32, i32) {
    %c0_i32 = arith.constant 0 : i32
    %c0_i32_0 = arith.constant 0 : i32
    %c0_i32_1 = arith.constant 0 : i32
    return %c0_i32, %c0_i32_0 : i32, i32
  }
  func.func @transform_4(%arg0: i32) -> (i32, i32) {
    %c0_i32 = arith.constant 0 : i32
    %c0_i32_0 = arith.constant 0 : i32
    %c0_i32_1 = arith.constant 0 : i32
    return %c0_i32, %c0_i32_0 : i32, i32
  }
  func.func @transform_5(%arg0: i32) -> (i32, i32) {
    %c0_i32 = arith.constant 0 : i32
    %c0_i32_0 = arith.constant 0 : i32
    return %arg0, %c0_i32 : i32, i32
  }
}

</mosaic_0001>

<llo_original>
// kernel: tpu_custom_call.1
$region0: #{tpu_custom_call.1}
  #allocation0 [shape = 'u32[]', space=smem, size = 0x4, offset = 0x4, fixed_abs, tag = 'smem constant byte address 0x4 - core index']
  #allocation1 [shape = 'u32[144,128]{1,0:T(1,128)}', space=vmem, size = 0x12000, scoped, tag = 'internal scratch']
  %s0 = inlined_call_operand.vmem [shape: f32[8,32], index: 0, kind: input, shape index: {}]
  %s1 = inlined_call_operand.hbm [shape: f32[32,384], index: 1, kind: input, shape index: {}]
  %s2 = inlined_call_operand.vmem [shape: f32[128,32], index: 2, kind: input, shape index: {}]
  %s3 = inlined_call_operand.vmem [shape: f32[1,32], index: 3, kind: input, shape index: {}]
  %s4 = inlined_call_operand.vmem [shape: f32[128,128], index: 4, kind: input, shape index: {}]
  %s5 = inlined_call_operand.hbm [shape: f32[8,32], index: 5, kind: output, shape index: {}]
  %s6 = sld [smem:[#allocation0]]
  $region34: #{tpu_custom_call.1} parent=0
    _
  %s8 = ssub.s32 1, %s6
  %s9 = scalar_select 0, %s8, %s6
  $region1: #{tpu_custom_call.1} parent=0
    #allocation2 [shape = 'u8[49152]{0}', space=vmem, size = 0xc000, scoped, tag = 'input window, operand 1, single buffered']
    #allocation3 [shape = 's32[1]{0}', space=sflag, size = 0x4, scoped, tag = 'scoped memory for tpu_custom_call.1']
    #allocation4 [shape = 's32[1]{0}', space=sflag, size = 0x4, scoped, tag = 'scoped memory for tpu_custom_call.1']
    #allocation5 [shape = 'u8[4096]{0}', space=vmem, size = 0x1000, scoped, tag = 'output window, operand 0, single buffered']
    %10 = vsyncpa [#allocation3], 0
    %11 = vsyncpa [#allocation4], 0
    // Predicated region
    $region2: #{tpu_custom_call.1} parent=1 // pred_check
      _
    $region3: #{tpu_custom_call.1} parent=1 // pred_check_branch
      %13 = sbr.rel (0) target = $region5
    $region4: #{tpu_custom_call.1} parent=1 // pred_region
      _
    $region5: #{tpu_custom_call.1} parent=1 // pred_fallthru
      _
    // Predicated region
    $region6: #{tpu_custom_call.1} parent=1 // pred_check
      _
    $region7: #{tpu_custom_call.1} parent=1 // pred_check_branch
      %15 = sbr.rel (0) target = $region9
    $region8: #{tpu_custom_call.1} parent=1 // pred_region
      %s17 = ssub.s32 1536, 1536
      %18 = vsyncadd [#allocation3], %s17
      %s19 = sshll.u32 [#allocation2], 4
      %s20 = int_to_ptr.vmem [resolvable:$true] %s19
      %25 = dma.hbm_to_vmem [thread:$0]  %s1, 1536, %s20, [#allocation3], 384, 384, 24
    $region9: #{tpu_custom_call.1} parent=1 // pred_fallthru
      _
    // Predicated region
    $region10: #{tpu_custom_call.1} parent=1 // pred_check
      _
    $region11: #{tpu_custom_call.1} parent=1 // pred_check_branch
      %27 = sbr.rel (0) target = $region13
    $region12: #{tpu_custom_call.1} parent=1 // pred_region
      _
    $region13: #{tpu_custom_call.1} parent=1 // pred_fallthru
      _
    // Predicated region
    $region14: #{tpu_custom_call.1} parent=1 // pred_check
      _
    $region15: #{tpu_custom_call.1} parent=1 // pred_check_branch
      %29 = sbr.rel (0) target = $region17
    $region16: #{tpu_custom_call.1} parent=1 // pred_region
      _
    $region17: #{tpu_custom_call.1} parent=1 // pred_fallthru
      _
    // Predicated region
    $region18: #{tpu_custom_call.1} parent=1 // pred_check
      _
    $region19: #{tpu_custom_call.1} parent=1 // pred_check_branch
      %31 = sbr.rel (0) target = $region21
    $region20: #{tpu_custom_call.1} parent=1 // pred_region
      _
    $region21: #{tpu_custom_call.1} parent=1 // pred_fallthru
      _
    // Predicated region
    $region22: #{tpu_custom_call.1} parent=1 // pred_check
      _
    $region23: #{tpu_custom_call.1} parent=1 // pred_check_branch
      %33 = sbr.rel (0) target = $region25
    $region24: #{tpu_custom_call.1} parent=1 // pred_region
      %34 = dma.done [#allocation3], 1536
    $region25: #{tpu_custom_call.1} parent=1 // pred_fallthru
      _
    %v35 = vld [vmem:[%s0] sm:$0xff]
    %v36 = vld [vmem:[#allocation2] sm:$0xff]
    %v37 = vld [vmem:[#allocation2 + $0x8] sm:$0xff]
    %v38 = vld [vmem:[#allocation2 + $0x10] sm:$0xff]
    %v39 = vld [vmem:[#allocation2 + $0x18] sm:$0xff]
    %v40 = vld [vmem:[#allocation2 + $0x20] sm:$0xff]
    %v41 = vld [vmem:[#allocation2 + $0x28] sm:$0xff]
    %v42 = vld [vmem:[#allocation2 + $0x30] sm:$0xff]
    %v43 = vld [vmem:[#allocation2 + $0x38] sm:$0xff]
    %v44 = vld [vmem:[#allocation2 + $0x40] sm:$0xff]
    %v45 = vld [vmem:[#allocation2 + $0x48] sm:$0xff]
    %v46 = vld [vmem:[#allocation2 + $0x50] sm:$0xff]
    %v47 = vld [vmem:[#allocation2 + $0x58] sm:$0xff]
    %vm48 = vcmask 261120
    %v50 = vsel %vm48, %v35, 0
    %52 = vmatprep.subr.mxu0 %v37
    %53 = vmatpush1.msra.mxu0 %v36
    %54 = vmatprep.subr.mxu0 %v40
    %55 = vmatpush1.msra.mxu0 %v39
    %56 = vmatprep.subr.mxu0 %v43
    %57 = vmatpush1.msra.mxu0 %v42
    %58 = vmatprep.subr.mxu0 %v46
    %59 = vmatpush1.msra.mxu0 %v45
    %60 = vmatprep.subr.mxu0 0.0
    %61 = vmatpush1.msra.mxu0 0.0
    %62 = vmatprep.subr.mxu0 0.0
    %63 = vmatpush1.msra.mxu0 0.0
    %64 = vmatprep.subr.mxu0 0.0
    %65 = vmatpush1.msra.mxu0 0.0
    %66 = vmatprep.subr.mxu0 0.0
    %67 = vmatpush1.msra.mxu0 0.0
    %68 = vmatprep.subr.mxu0 0.0
    %69 = vmatpush1.msra.mxu0 0.0
    %70 = vmatprep.subr.mxu0 0.0
    %71 = vmatpush1.msra.mxu0 0.0
    %72 = vmatprep.subr.mxu0 0.0
    %73 = vmatpush1.msra.mxu0 0.0
    %74 = vmatprep.subr.mxu0 0.0
    %75 = vmatpush1.msra.mxu0 0.0
    %76 = vmatprep.subr.mxu0 0.0
    %77 = vmatpush1.msra.mxu0 0.0
    %78 = vmatprep.subr.mxu0 0.0
    %79 = vmatpush1.msra.mxu0 0.0
    %80 = vmatprep.subr.mxu0 0.0
    %81 = vmatpush1.msra.mxu0 0.0
    %82 = vmatprep.subr.mxu0 0.0
    %83 = vmatpush1.msra.mxu0 0.0
    %84 = vmatprep.subr.mxu0 0.0
    %85 = vmatpush1.msra.mxu0 0.0
    %86 = vmatprep.subr.mxu0 0.0
    %87 = vmatpush1.msra.mxu0 0.0
    %88 = vmatprep.subr.mxu0 0.0
    %89 = vmatpush1.msra.mxu0 0.0
    %90 = vmatprep.subr.mxu0 0.0
    %91 = vmatpush1.msra.mxu0 0.0
    %92 = vmatprep.subr.mxu0 0.0
    %93 = vmatpush1.msra.mxu0 0.0
    %94 = vmatprep.subr.mxu0 0.0
    %95 = vmatpush1.msra.mxu0 0.0
    %96 = vmatprep.subr.mxu0 0.0
    %97 = vmatpush1.msra.mxu0 0.0
    %98 = vmatprep.subr.mxu0 0.0
    %99 = vmatpush1.msra.mxu0 0.0
    %100 = vmatprep.subr.mxu0 0.0
    %101 = vmatpush1.msra.mxu0 0.0
    %102 = vmatprep.subr.mxu0 0.0
    %103 = vmatpush1.msra.mxu0 0.0
    %104 = vmatprep.subr.mxu0 0.0
    %105 = vmatpush1.msra.mxu0 0.0
    %106 = vmatprep.subr.mxu0 0.0
    %107 = vmatpush1.msra.mxu0 0.0
    %108 = vmatprep.subr.mxu0 0.0
    %109 = vmatpush1.msra.mxu0 0.0
    %110 = vmatprep.subr.mxu0 0.0
    %111 = vmatpush1.msra.mxu0 0.0
    %112 = vmatprep.subr.mxu0 0.0
    %113 = vmatpush1.msra.mxu0 0.0
    %114 = vmatprep.subr.mxu0 0.0
    %115 = vmatpush1.msra.mxu0 0.0
    %116 = vmatprep.mubr.f32.mxu0 0.0
    %117 = vmatmul.mubr.f32.gmra.mrb[0].mxu0 %v50
    %v118 = vpop.f32.mrb[0].mxu0
    %v119 = vadd.f32 0.0, %v118
    %v120 = vpop.f32.mrb[0].mxu0
    %v121 = vadd.f32 0.0, %v120
    %122 = vdwg.mxu0
    %123 = vmatprep.subr.mxu0 0.0
    %124 = vmatpush1.msra.mxu0 %v38
    %125 = vmatprep.subr.mxu0 0.0
    %126 = vmatpush1.msra.mxu0 %v41
    %127 = vmatprep.subr.mxu0 0.0
    %128 = vmatpush1.msra.mxu0 %v44
    %129 = vmatprep.subr.mxu0 0.0
    %130 = vmatpush1.msra.mxu0 %v47
    %131 = vmatprep.subr.mxu0 0.0
    %132 = vmatpush1.msra.mxu0 0.0
    %133 = vmatprep.subr.mxu0 0.0
    %134 = vmatpush1.msra.mxu0 0.0
    %135 = vmatprep.subr.mxu0 0.0
    %136 = vmatpush1.msra.mxu0 0.0
    %137 = vmatprep.subr.mxu0 0.0
    %138 = vmatpush1.msra.mxu0 0.0
    %139 = vmatprep.subr.mxu0 0.0
    %140 = vmatpush1.msra.mxu0 0.0
    %141 = vmatprep.subr.mxu0 0.0
    %142 = vmatpush1.msra.mxu0 0.0
    %143 = vmatprep.subr.mxu0 0.0
    %144 = vmatpush1.msra.mxu0 0.0
    %145 = vmatprep.subr.mxu0 0.0
    %146 = vmatpush1.msra.mxu0 0.0
    %147 = vmatprep.subr.mxu0 0.0
    %148 = vmatpush1.msra.mxu0 0.0
    %149 = vmatprep.subr.mxu0 0.0
    %150 = vmatpush1.msra.mxu0 0.0
    %151 = vmatprep.subr.mxu0 0.0
    %152 = vmatpush1.msra.mxu0 0.0
    %153 = vmatprep.subr.mxu0 0.0
    %154 = vmatpush1.msra.mxu0 0.0
    %155 = vmatprep.subr.mxu0 0.0
    %156 = vmatpush1.msra.mxu0 0.0
    %157 = vmatprep.subr.mxu0 0.0
    %158 = vmatpush1.msra.mxu0 0.0
    %159 = vmatprep.subr.mxu0 0.0
    %160 = vmatpush1.msra.mxu0 0.0
    %161 = vmatprep.subr.mxu0 0.0
    %162 = vmatpush1.msra.mxu0 0.0
    %163 = vmatprep.subr.mxu0 0.0
    %164 = vmatpush1.msra.mxu0 0.0
    %165 = vmatprep.subr.mxu0 0.0
    %166 = vmatpush1.msra.mxu0 0.0
    %167 = vmatprep.subr.mxu0 0.0
    %168 = vmatpush1.msra.mxu0 0.0
    %169 = vmatprep.subr.mxu0 0.0
    %170 = vmatpush1.msra.mxu0 0.0
    %171 = vmatprep.subr.mxu0 0.0
    %172 = vmatpush1.msra.mxu0 0.0
    %173 = vmatprep.subr.mxu0 0.0
    %174 = vmatpush1.msra.mxu0 0.0
    %175 = vmatprep.subr.mxu0 0.0
    %176 = vmatpush1.msra.mxu0 0.0
    %177 = vmatprep.subr.mxu0 0.0
    %178 = vmatpush1.msra.mxu0 0.0
    %179 = vmatprep.subr.mxu0 0.0
    %180 = vmatpush1.msra.mxu0 0.0
    %181 = vmatprep.subr.mxu0 0.0
    %182 = vmatpush1.msra.mxu0 0.0
    %183 = vmatprep.subr.mxu0 0.0
    %184 = vmatpush1.msra.mxu0 0.0
    %185 = vmatprep.subr.mxu0 0.0
    %186 = vmatpush1.msra.mxu0 0.0
    %187 = vmatprep.mubr.f32.mxu0 0.0
    %188 = vmatmul.mubr.f32.gmra.mrb[0].mxu0 %v50
    %v189 = vpop.f32.mrb[0].mxu0
    %v190 = vadd.f32 0.0, %v189
    %v191 = vpop.f32.mrb[0].mxu0
    %192 = vdwg.mxu0
    %v193 = vmul.f32 %v119, %v121
    %v194 = vld [vmem:[%s4] sm:$0xff]
    %v195 = vld [vmem:[%s4 + $0x8] sm:$0xff]
    %v196 = vld [vmem:[%s4 + $0x10] sm:$0xff]
    %v197 = vld [vmem:[%s4 + $0x18] sm:$0xff]
    %v198 = vld [vmem:[%s4 + $0x20] sm:$0xff]
    %v199 = vld [vmem:[%s4 + $0x28] sm:$0xff]
    %v200 = vld [vmem:[%s4 + $0x30] sm:$0xff]
    %v201 = vld [vmem:[%s4 + $0x38] sm:$0xff]
    %v202 = vld [vmem:[%s4 + $0x40] sm:$0xff]
    %v203 = vld [vmem:[%s4 + $0x48] sm:$0xff]
    %v204 = vld [vmem:[%s4 + $0x50] sm:$0xff]
    %v205 = vld [vmem:[%s4 + $0x58] sm:$0xff]
    %v206 = vld [vmem:[%s4 + $0x60] sm:$0xff]
    %v207 = vld [vmem:[%s4 + $0x68] sm:$0xff]
    %v208 = vld [vmem:[%s4 + $0x70] sm:$0xff]
    %v209 = vld [vmem:[%s4 + $0x78] sm:$0xff]
    %210 = vmatprep.subr.mxu0 0.0
    %211 = vmatpush1.msra.mxu0 %v194
    %212 = vmatprep.subr.mxu0 0.0
    %213 = vmatpush1.msra.mxu0 %v195
    %214 = vmatprep.subr.mxu0 0.0
    %215 = vmatpush1.msra.mxu0 %v196
    %216 = vmatprep.subr.mxu0 0.0
    %217 = vmatpush1.msra.mxu0 %v197
    %218 = vmatprep.subr.mxu0 0.0
    %219 = vmatpush1.msra.mxu0 %v198
    %220 = vmatprep.subr.mxu0 0.0
    %221 = vmatpush1.msra.mxu0 %v199
    %222 = vmatprep.subr.mxu0 0.0
    %223 = vmatpush1.msra.mxu0 %v200
    %224 = vmatprep.subr.mxu0 0.0
    %225 = vmatpush1.msra.mxu0 %v201
    %226 = vmatprep.subr.mxu0 0.0
    %227 = vmatpush1.msra.mxu0 %v202
    %228 = vmatprep.subr.mxu0 0.0
    %229 = vmatpush1.msra.mxu0 %v203
    %230 = vmatprep.subr.mxu0 0.0
    %231 = vmatpush1.msra.mxu0 %v204
    %232 = vmatprep.subr.mxu0 0.0
    %233 = vmatpush1.msra.mxu0 %v205
    %234 = vmatprep.subr.mxu0 0.0
    %235 = vmatpush1.msra.mxu0 %v206
    %236 = vmatprep.subr.mxu0 0.0
    %237 = vmatpush1.msra.mxu0 %v207
    %238 = vmatprep.subr.mxu0 0.0
    %239 = vmatpush1.msra.mxu0 %v208
    %240 = vmatprep.subr.mxu0 0.0
    %241 = vmatpush1.msra.mxu0 %v209
    %242 = vmatprep.subr.mxu0 0.0
    %243 = vmatpush1.msra.mxu0 0.0
    %244 = vmatprep.subr.mxu0 0.0
    %245 = vmatpush1.msra.mxu0 0.0
    %246 = vmatprep.subr.mxu0 0.0
    %247 = vmatpush1.msra.mxu0 0.0
    %248 = vmatprep.subr.mxu0 0.0
    %249 = vmatpush1.msra.mxu0 0.0
    %250 = vmatprep.subr.mxu0 0.0
    %251 = vmatpush1.msra.mxu0 0.0
    %252 = vmatprep.subr.mxu0 0.0
    %253 = vmatpush1.msra.mxu0 0.0
    %254 = vmatprep.subr.mxu0 0.0
    %255 = vmatpush1.msra.mxu0 0.0
    %256 = vmatprep.subr.mxu0 0.0
    %257 = vmatpush1.msra.mxu0 0.0
    %258 = vmatprep.subr.mxu0 0.0
    %259 = vmatpush1.msra.mxu0 0.0
    %260 = vmatprep.subr.mxu0 0.0
    %261 = vmatpush1.msra.mxu0 0.0
    %262 = vmatprep.subr.mxu0 0.0
    %263 = vmatpush1.msra.mxu0 0.0
    %264 = vmatprep.subr.mxu0 0.0
    %265 = vmatpush1.msra.mxu0 0.0
    %266 = vmatprep.subr.mxu0 0.0
    %267 = vmatpush1.msra.mxu0 0.0
    %268 = vmatprep.subr.mxu0 0.0
    %269 = vmatpush1.msra.mxu0 0.0
    %270 = vmatprep.subr.mxu0 0.0
    %271 = vmatpush1.msra.mxu0 0.0
    %272 = vmatprep.subr.mxu0 0.0
    %273 = vmatpush1.msra.mxu0 0.0
    %274 = vmatprep.mubr.f32.mxu0 0.0
    %275 = vmatmul.mubr.f32.gmra.mrb[0].mxu0 %v193
    %v276 = vpop.f32.mrb[0].mxu0
    %v277 = vadd.f32 0.0, %v276
    %v278 = vpop.f32.mrb[0].mxu0
    %279 = vdwg.mxu0
    %280 = vmax.xlane.f32.xlu0 %v277
    %v281 = vpop.xlane.xlu0 %280
    %v282 = vsub.f32 %v277, %v281
    %v283 = vmul.f32 %v282, 1.442695
    %v284 = vpow.pop %v283
    %285 = vadd.xlane.f32.xlu0 %v284
    %v286 = vpop.xlane.xlu0 %285
    %v287 = vmul.f32 %v286, 0.0625
    %v288 = vrcp.pop %v287
    %v289 = vmul.f32 %v284, %v288
    %v290 = vmul.f32 %v289, %v190
    %v291 = vld [vmem:[%s2] sm:$0xff]
    %v292 = vld [vmem:[%s2 + $0x8] sm:$0xff]
    %v293 = vld [vmem:[%s2 + $0x10] sm:$0xff]
    %v294 = vld [vmem:[%s2 + $0x18] sm:$0xff]
    %v295 = vld [vmem:[%s2 + $0x20] sm:$0xff]
    %v296 = vld [vmem:[%s2 + $0x28] sm:$0xff]
    %v297 = vld [vmem:[%s2 + $0x30] sm:$0xff]
    %v298 = vld [vmem:[%s2 + $0x38] sm:$0xff]
    %v299 = vld [vmem:[%s2 + $0x40] sm:$0xff]
    %v300 = vld [vmem:[%s2 + $0x48] sm:$0xff]
    %v301 = vld [vmem:[%s2 + $0x50] sm:$0xff]
    %v302 = vld [vmem:[%s2 + $0x58] sm:$0xff]
    %v303 = vld [vmem:[%s2 + $0x60] sm:$0xff]
    %v304 = vld [vmem:[%s2 + $0x68] sm:$0xff]
    %v305 = vld [vmem:[%s2 + $0x70] sm:$0xff]
    %v306 = vld [vmem:[%s2 + $0x78] sm:$0xff]
    %v307 = vld [vmem:[%s3] sm:$0x1]
    %v309 = vlaneseq
    %v310 = vshrl.u32 %v309, 7
    %v311 = vsub.s32 0, %v310
    %v312 = vrot.slane %v307, %v311
    %314 = vmatprep.subr.mxu0 0.0
    %315 = vmatpush1.msra.mxu0 %v291
    %316 = vmatprep.subr.mxu0 0.0
    %317 = vmatpush1.msra.mxu0 %v292
    %318 = vmatprep.subr.mxu0 0.0
    %319 = vmatpush1.msra.mxu0 %v293
    %320 = vmatprep.subr.mxu0 0.0
    %321 = vmatpush1.msra.mxu0 %v294
    %322 = vmatprep.subr.mxu0 0.0
    %323 = vmatpush1.msra.mxu0 %v295
    %324 = vmatprep.subr.mxu0 0.0
    %325 = vmatpush1.msra.mxu0 %v296
    %326 = vmatprep.subr.mxu0 0.0
    %327 = vmatpush1.msra.mxu0 %v297
    %328 = vmatprep.subr.mxu0 0.0
    %329 = vmatpush1.msra.mxu0 %v298
    %330 = vmatprep.subr.mxu0 0.0
    %331 = vmatpush1.msra.mxu0 %v299
    %332 = vmatprep.subr.mxu0 0.0
    %333 = vmatpush1.msra.mxu0 %v300
    %334 = vmatprep.subr.mxu0 0.0
    %335 = vmatpush1.msra.mxu0 %v301
    %336 = vmatprep.subr.mxu0 0.0
    %337 = vmatpush1.msra.mxu0 %v302
    %338 = vmatprep.subr.mxu0 0.0
    %339 = vmatpush1.msra.mxu0 %v303
    %340 = vmatprep.subr.mxu0 0.0
    %341 = vmatpush1.msra.mxu0 %v304
    %342 = vmatprep.subr.mxu0 0.0
    %343 = vmatpush1.msra.mxu0 %v305
    %344 = vmatprep.subr.mxu0 0.0
    %345 = vmatpush1.msra.mxu0 %v306
    %346 = vmatprep.subr.mxu0 0.0
    %347 = vmatpush1.msra.mxu0 0.0
    %348 = vmatprep.subr.mxu0 0.0
    %349 = vmatpush1.msra.mxu0 0.0
    %350 = vmatprep.subr.mxu0 0.0
    %351 = vmatpush1.msra.mxu0 0.0
    %352 = vmatprep.subr.mxu0 0.0
    %353 = vmatpush1.msra.mxu0 0.0
    %354 = vmatprep.subr.mxu0 0.0
    %355 = vmatpush1.msra.mxu0 0.0
    %356 = vmatprep.subr.mxu0 0.0
    %357 = vmatpush1.msra.mxu0 0.0
    %358 = vmatprep.subr.mxu0 0.0
    %359 = vmatpush1.msra.mxu0 0.0
    %360 = vmatprep.subr.mxu0 0.0
    %361 = vmatpush1.msra.mxu0 0.0
    %362 = vmatprep.subr.mxu0 0.0
    %363 = vmatpush1.msra.mxu0 0.0
    %364 = vmatprep.subr.mxu0 0.0
    %365 = vmatpush1.msra.mxu0 0.0
    %366 = vmatprep.subr.mxu0 0.0
    %367 = vmatpush1.msra.mxu0 0.0
    %368 = vmatprep.subr.mxu0 0.0
    %369 = vmatpush1.msra.mxu0 0.0
    %370 = vmatprep.subr.mxu0 0.0
    %371 = vmatpush1.msra.mxu0 0.0
    %372 = vmatprep.subr.mxu0 0.0
    %373 = vmatpush1.msra.mxu0 0.0
    %374 = vmatprep.subr.mxu0 0.0
    %375 = vmatpush1.msra.mxu0 0.0
    %376 = vmatprep.subr.mxu0 0.0
    %377 = vmatpush1.msra.mxu0 0.0
    %378 = vmatprep.mubr.f32.mxu0 0.0
    %379 = vmatmul.mubr.f32.gmra.mrb[0].mxu0 %v290
    %v380 = vpop.f32.mrb[0].mxu0
    %v381 = vadd.f32 %v312, %v380
    %v382 = vpop.f32.mrb[0].mxu0
    %383 = vdwg.mxu0
    %384 = vst.msk [vmem:[#allocation5] sm:$0xff] %vm48, %v381
    // Predicated region
    $region26: #{tpu_custom_call.1} parent=1 // pred_check
      _
    $region27: #{tpu_custom_call.1} parent=1 // pred_check_branch
      %386 = sbr.rel (0) target = $region29
    $region28: #{tpu_custom_call.1} parent=1 // pred_region
      %s388 = ssub.s32 128, 128
      %389 = vsyncadd [#allocation4], %s388
      %s391 = sshll.u32 [#allocation5], 4
      %s392 = int_to_ptr.vmem [resolvable:$true] %s391
      %394 = dma.vmem_to_hbm [thread:$0]  %s392, 128, %s5, [#allocation4]
    $region29: #{tpu_custom_call.1} parent=1 // pred_fallthru
      _
    // Predicated region
    $region30: #{tpu_custom_call.1} parent=1 // pred_check
      _
    $region31: #{tpu_custom_call.1} parent=1 // pred_check_branch
      %396 = sbr.rel (0) target = $region33
    $region32: #{tpu_custom_call.1} parent=1 // pred_region
      %397 = dma.done [#allocation4], 128
    $region33: #{tpu_custom_call.1} parent=1 // pred_fallthru
      _
    %398 = vsyncpa [#allocation3], 1
    %399 = vsyncpa [#allocation4], 1

</llo_original>
